<compile_context>
chip_gen: v7x
topology: tpu7x:2x2x1
jax: 0.10.0
libtpu: 0.0.40
codegen_flags: <defaults>
</compile_context>

<pallas_src>
import math

import jax
import jax.numpy as jnp
from jax.experimental import pallas as pl
from jax.experimental.pallas import tpu as pltpu


def _round_up(x, m):
    return (x + m - 1) // m * m


def _vmem_budget_bytes():
    """~75% of per-core VMEM capacity (48 MiB v7x, 96 MiB v5e/v6e)."""
    try:
        cap = int(getattr(pltpu.get_tpu_info(), "vmem_capacity_bytes"))
    except Exception:
        cap = 64 << 20          # conservative (v7x-sized) fallback
    return max(32 << 20, cap * 3 // 4)


def _pick_row_tile(np_m, cap, want_two=True):
    """Pick TM (multiple of 8) that divides the (possibly re-padded) row count.

    Prefers an exact divisor of the 8-aligned row count; only pads further
    (by < one 128-row tile) if no reasonable divisor exists.  Optionally
    splits into >=2 tiles so the 'parallel' row axis feeds both v7x cores.
    """
    cap = max(8, min(cap, np_m) // 8 * 8)
    tm = None
    for cand in range(cap, 7, -8):
        if np_m % cand == 0:
            tm = cand
            break
    if tm is None or (tm < min(cap, 128) and tm != np_m):
        tm = min(cap, 128)
        np_m = _round_up(np_m, tm)
    if want_two and np_m // tm < 2 and np_m >= 16:
        for cand in range((np_m // 2) // 8 * 8, 7, -8):
            if np_m % cand == 0:
                tm = cand
                break
    return tm, np_m


# --------------------- Stage 1: support = x @ W (row-tiled) ---------------------
def _support_kernel(x_ref, w_ref, s_ref):
    s_ref[...] = jnp.dot(
        x_ref[...], w_ref[...], preferred_element_type=jnp.float32
    ).astype(s_ref.dtype)


# ---------- Stage 2, Path A: resident support, out = adj_stripe @ S + b ----------
def _gcn_resident_kernel(adj_ref, s_ref, b_ref, out_ref):
    adj = adj_ref[...].astype(jnp.bfloat16)     # in-kernel cast (no HBM pre-pass)
    out_ref[...] = (
        jnp.dot(adj, s_ref[...], preferred_element_type=jnp.float32) + b_ref[...]
    ).astype(out_ref.dtype)


# ---------- Stage 2, Path B: K-tiled reduction with f32 VMEM accumulator ---------
def _gcn_tiled_kernel(adj_ref, s_ref, b_ref, out_ref, acc_ref):
    k = pl.program_id(1)

    @pl.when(k == 0)
    def _():
        acc_ref[...] = jnp.zeros_like(acc_ref)

    acc_ref[...] += jnp.dot(
        adj_ref[...].astype(jnp.bfloat16), s_ref[...],
        preferred_element_type=jnp.float32)

    @pl.when(k == pl.num_programs(1) - 1)
    def _():
        out_ref[...] = (acc_ref[...] + b_ref[...]).astype(out_ref.dtype)


def gg_forward(x, adj, weight, bias=None, func="GCN", graph=None,
               tm=512, tk=512, out_dtype=jnp.float32, _force_tiled=False):
    """JAX/Pallas equivalent of GG.forward for func='GCN'.

    `out_dtype=jnp.bfloat16` halves the stage-2 writeback (useful on v5e).
    """
    if func != "GCN":
        # TODO(synk): MEAN/MAX/MIN use host-side random.shuffle + ragged loops.
        raise NotImplementedError(f"func={func!r} not implemented in Pallas")

    N, Fin = x.shape
    Fout = weight.shape[1]
    f32, bf16 = jnp.float32, jnp.bfloat16

    # Enforce tile-arg alignment (robust against unaligned user tm/tk).
    tm = max(8, int(tm) // 8 * 8)
    tk = max(128, int(tk) // 128 * 128)

    # Pad only to (8,128) alignment — never to TM/TK multiples up front.
    Np_k = _round_up(N, 128)        # reduction dim (adj cols / support rows)
    Np_m0 = _round_up(N, 8)         # row dim, 8-aligned
    Fp = _round_up(Fout, 128)       # lane-dense output width

    budget = _vmem_budget_bytes()
    headroom = 8 << 20
    adj_itemsize = jnp.dtype(adj.dtype).itemsize

    # -------------------------- stage 1: support ------------------------------
    TS = 128
    for cand in range(min(512, Np_k), 127, -128):
        if Np_k % cand == 0:
            TS = cand
            break
    x_p = jnp.zeros((Np_k, Fin), bf16).at[:N, :].set(x.astype(bf16))
    w_p = jnp.zeros((Fin, Fp), bf16).at[:, :Fout].set(weight.astype(bf16))
    vmem1 = 2 * TS * Fin * 2 + 2 * Fin * Fp * 2 + 2 * TS * Fp * 2
    support = pl.pallas_call(
        _support_kernel,
        out_shape=jax.ShapeDtypeStruct((Np_k, Fp), bf16),
        grid=(Np_k // TS,),
        in_specs=[
            pl.BlockSpec((TS, Fin), lambda i: (i, 0)),   # x row tile
            pl.BlockSpec((Fin, Fp), lambda i: (0, 0)),   # full weight
        ],
        out_specs=pl.BlockSpec((TS, Fp), lambda i: (i, 0)),
        compiler_params=pltpu.CompilerParams(
            dimension_semantics=("parallel",),
            vmem_limit_bytes=int(min(budget, max(vmem1 + headroom, 32 << 20))),
        ),
    )(x_p, w_p)

    # Bias row, lane-dense, f32 (zeros when bias is None — adding 0 == no bias).
    b_p = jnp.zeros((1, Fp), f32)
    if bias is not None:
        b_p = b_p.at[0, :Fout].set(bias.astype(f32))

    # ------------------ stage 2 planning: resident vs tiled --------------------
    support_bytes = 2 * Np_k * Fp * 2                 # count 2 buffers (safe)
    per_row_a = 2 * Np_k * adj_itemsize + 2 * Fp * 4  # adj stripe + out rows
    avail_a = budget - support_bytes - 2 * Fp * 4 - headroom
    tm_fit_a = (avail_a // per_row_a) // 8 * 8 if avail_a > 0 else 0
    use_resident = (not _force_tiled) and tm_fit_a >= 64

    if use_resident:
        TM, Np_m = _pick_row_tile(Np_m0, min(tm, tm_fit_a))
        TK = Np_k
    else:
        TK = 128
        for cand in range(min(tk, Np_k), 127, -128):
            if Np_k % cand == 0:
                TK = cand
                break
        fixed_b = 2 * TK * Fp * 2 + 2 * Fp * 4 + headroom
        per_row_b = 2 * TK * adj_itemsize + 3 * Fp * 4   # adj + out + acc rows
        avail_b = budget - fixed_b
        tm_fit_b = max(8, (avail_b // per_row_b) // 8 * 8) if avail_b > 0 else 8
        TM, Np_m = _pick_row_tile(Np_m0, min(tm, tm_fit_b))

    # Pad adj only when the aligned shape actually differs; otherwise stream it
    # as-is (f32) and cast inside the kernel (no full-array pad/cast pre-pass).
    if (Np_m != N) or (Np_k != N):
        adj_in = jnp.zeros((Np_m, Np_k), bf16).at[:N, :N].set(adj.astype(bf16))
        ab = 2
    else:
        adj_in = adj
        ab = adj_itemsize

    out_bytes = jnp.dtype(out_dtype).itemsize

    if use_resident:
        vmem2 = (2 * TM * Np_k * ab + 2 * Np_k * Fp * 2
                 + 2 * Fp * 4 + 2 * TM * Fp * out_bytes)
        out_p = pl.pallas_call(
            _gcn_resident_kernel,
            out_shape=jax.ShapeDtypeStruct((Np_m, Fp), out_dtype),
            grid=(Np_m // TM,),
            in_specs=[
                pl.BlockSpec((TM, Np_k), lambda i: (i, 0)),   # adj row stripe
                pl.BlockSpec((Np_k, Fp), lambda i: (0, 0)),   # resident support
                pl.BlockSpec((1, Fp), lambda i: (0, 0)),      # bias row
            ],
            out_specs=pl.BlockSpec((TM, Fp), lambda i: (i, 0)),
            compiler_params=pltpu.CompilerParams(
                dimension_semantics=("parallel",),
                vmem_limit_bytes=int(min(budget, max(vmem2 + headroom, 32 << 20))),
            ),
        )(adj_in, support, b_p)
    else:
        vmem2 = (2 * TM * TK * ab + 2 * TK * Fp * 2 + 2 * Fp * 4
                 + 2 * TM * Fp * out_bytes + TM * Fp * 4)
        out_p = pl.pallas_call(
            _gcn_tiled_kernel,
            out_shape=jax.ShapeDtypeStruct((Np_m, Fp), out_dtype),
            grid=(Np_m // TM, Np_k // TK),
            in_specs=[
                pl.BlockSpec((TM, TK), lambda i, k: (i, k)),   # adj tile
                pl.BlockSpec((TK, Fp), lambda i, k: (k, 0)),   # support tile
                pl.BlockSpec((1, Fp), lambda i, k: (0, 0)),    # bias row
            ],
            out_specs=pl.BlockSpec((TM, Fp), lambda i, k: (i, 0)),
            scratch_shapes=[pltpu.VMEM((TM, Fp), f32)],
            compiler_params=pltpu.CompilerParams(
                dimension_semantics=("parallel", "arbitrary"),
                vmem_limit_bytes=int(min(budget, max(vmem2 + headroom, 32 << 20))),
            ),
        )(adj_in, support, b_p)

    return out_p[:N, :Fout]


def _run_case(key, N, Fin, Fout, with_bias, **kw):
    k_x, k_adj, k_w, k_b = jax.random.split(key, 4)

    x = jax.random.normal(k_x, (N, Fin), dtype=jnp.float32)

    # Dense, symmetric, row-normalized adjacency (with self loops).
    a = (jax.random.uniform(k_adj, (N, N)) > 0.7).astype(jnp.float32)
    a = jnp.maximum(a, a.T) + jnp.eye(N, dtype=jnp.float32)
    adj = a / jnp.sum(a, axis=1, keepdims=True)

    # Parameter init mirroring reset_parameters(): uniform(-stdv, stdv).
    stdv = 1.0 / math.sqrt(Fout)
    weight = jax.random.uniform(k_w, (Fin, Fout), minval=-stdv, maxval=stdv,
                                dtype=jnp.float32)
    bias = None
    if with_bias:
        bias = jax.random.uniform(k_b, (Fout,), minval=-stdv, maxval=stdv,
                                  dtype=jnp.float32)

    out = gg_forward(x, adj, weight, bias, func="GCN", **kw)
    out = jax.block_until_ready(out)

    ref = adj @ (x @ weight)
    if bias is not None:
        ref = ref + bias
    assert out.shape == (N, Fout), out.shape
    max_err = float(jnp.max(jnp.abs(out - ref)))
    assert jnp.allclose(out, ref, atol=2e-2, rtol=2e-2), (N, Fin, Fout, max_err)
    return max_err


if __name__ == "__main__":
    root = jax.random.PRNGKey(0)
    keys = jax.random.split(root, 3)

    # Path A (resident support) with ragged N / Fout -> exercises padding.
    _run_case(keys[0], 64, 32, 48, True)
    # Path A, fully (8,128)-aligned -> adj streamed raw f32 with in-kernel
    # bf16 cast (no pad/cast pre-pass).
    _run_case(keys[1], 256, 64, 128, True)
    # Path B (K-tiled accumulator fallback), multi-step reduction, no bias.
    _run_case(keys[2], 384, 32, 48, False, tk=128, _force_tiled=True)

    print("KERNEL_OK")
</pallas_src>

<mosaic_0001>
module attributes {stable_mosaic.version = 11 : i64} {
  func.func @_support_kernel(%arg0: i32, %arg1: memref<128x32xbf16, #tpu.memory_space<vmem>>, %arg2: memref<32x128xbf16, #tpu.memory_space<vmem>>, %arg3: memref<128x128xbf16, #tpu.memory_space<vmem>>) attributes {dimension_semantics = [#tpu.dimension_semantics<parallel>], iteration_bounds = array<i64: 1>, scalar_prefetch = 0 : i64, scratch_operands = 0 : i64, tpu.core_type = #tpu.core_type<tc>, window_params = [{transform_indices = @transform_0, window_bounds = array<i64: 128, 32>}, {pipeline_mode = #tpu.pipeline_mode<synchronous>, transform_indices = @transform_1, window_bounds = array<i64: 32, 128>}, {transform_indices = @transform_2, window_bounds = array<i64: 128, 128>}]} {
    %c0 = arith.constant 0 : index
    %c0_0 = arith.constant 0 : index
    %0 = vector.load %arg1[%c0, %c0_0] : memref<128x32xbf16, #tpu.memory_space<vmem>>, vector<128x32xbf16>
    %c0_1 = arith.constant 0 : index
    %c0_2 = arith.constant 0 : index
    %1 = vector.load %arg2[%c0_1, %c0_2] : memref<32x128xbf16, #tpu.memory_space<vmem>>, vector<32x128xbf16>
    %cst = arith.constant dense<0.000000e+00> : vector<128x128xf32>
    %2 = tpu.matmul %0, %1, %cst {dimension_numbers = #tpu.dot_dimension_numbers<[1], [0], [0], [1], [0, 0, 1, 1], [], []>} : vector<128x32xbf16>, vector<32x128xbf16>, vector<128x128xf32> -> vector<128x128xf32>
    %3 = arith.truncf %2 : vector<128x128xf32> to vector<128x128xbf16>
    %c0_3 = arith.constant 0 : index
    %c0_4 = arith.constant 0 : index
    %4 = vector.load %arg3[%c0_3, %c0_4] : memref<128x128xbf16, #tpu.memory_space<vmem>>, vector<128x128xbf16>
    tpu.vector_store %arg3[%c0_3, %c0_4], %3 {strides = array<i32>} : memref<128x128xbf16, #tpu.memory_space<vmem>>, vector<128x128xbf16>,
    return
  }
  func.func @transform_0(%arg0: i32) -> (i32, i32) {
    %c0_i32 = arith.constant 0 : i32
    %c0_i32_0 = arith.constant 0 : i32
    return %arg0, %c0_i32 : i32, i32
  }
  func.func @transform_1(%arg0: i32) -> (i32, i32) {
    %c0_i32 = arith.constant 0 : i32
    %c0_i32_0 = arith.constant 0 : i32
    %c0_i32_1 = arith.constant 0 : i32
    return %c0_i32, %c0_i32_0 : i32, i32
  }
  func.func @transform_2(%arg0: i32) -> (i32, i32) {
    %c0_i32 = arith.constant 0 : i32
    %c0_i32_0 = arith.constant 0 : i32
    return %arg0, %c0_i32 : i32, i32
  }
}

</mosaic_0001>

<llo_original>
// kernel: tpu_custom_call.1
$region0: #{tpu_custom_call.1}
  #allocation0 [shape = 'u32[]', space=smem, size = 0x4, offset = 0x4, fixed_abs, tag = 'smem constant byte address 0x4 - core index']
  #allocation1 [shape = 'u32[144,128]{1,0:T(1,128)}', space=vmem, size = 0x12000, scoped, tag = 'internal scratch']
  %s0 = inlined_call_operand.vmem [shape: bf16[128,32], index: 0, kind: input, shape index: {}]
  %s1 = inlined_call_operand.vmem [shape: bf16[32,128], index: 1, kind: input, shape index: {}]
  %s2 = inlined_call_operand.hbm [shape: bf16[128,128], index: 2, kind: output, shape index: {}]
  %s3 = sld [smem:[#allocation0]]
  $region18: #{tpu_custom_call.1} parent=0
    _
  %s5 = ssub.s32 1, %s3
  %s6 = scalar_select 0, %s5, %s3
  $region1: #{tpu_custom_call.1} parent=0
    #allocation2 [shape = 'u8[32768]{0}', space=vmem, size = 0x8000, scoped, tag = 'output window, operand 0, single buffered']
    #allocation3 [shape = 's32[1]{0}', space=sflag, size = 0x4, scoped, tag = 'scoped memory for tpu_custom_call.1']
    %7 = vsyncpa [#allocation3], 0
    // Predicated region
    $region2: #{tpu_custom_call.1} parent=1 // pred_check
      _
    $region3: #{tpu_custom_call.1} parent=1 // pred_check_branch
      %9 = sbr.rel (0) target = $region5
    $region4: #{tpu_custom_call.1} parent=1 // pred_region
      _
    $region5: #{tpu_custom_call.1} parent=1 // pred_fallthru
      _
    // Predicated region
    $region6: #{tpu_custom_call.1} parent=1 // pred_check
      _
    $region7: #{tpu_custom_call.1} parent=1 // pred_check_branch
      %11 = sbr.rel (0) target = $region9
    $region8: #{tpu_custom_call.1} parent=1 // pred_region
      _
    $region9: #{tpu_custom_call.1} parent=1 // pred_fallthru
      _
    %v13 = vld [vmem:[%s0] sm:$0xf]
    %v14 = vld [vmem:[%s0 + $0x4] sm:$0xf]
    %v15 = vld [vmem:[%s0 + $0x8] sm:$0xf]
    %v16 = vld [vmem:[%s0 + $0xc] sm:$0xf]
    %v17 = vld [vmem:[%s0 + $0x10] sm:$0xf]
    %v18 = vld [vmem:[%s0 + $0x14] sm:$0xf]
    %v19 = vld [vmem:[%s0 + $0x18] sm:$0xf]
    %v20 = vld [vmem:[%s0 + $0x1c] sm:$0xf]
    %v21 = vld [vmem:[%s0 + $0x20] sm:$0xf]
    %v22 = vld [vmem:[%s0 + $0x24] sm:$0xf]
    %v23 = vld [vmem:[%s0 + $0x28] sm:$0xf]
    %v24 = vld [vmem:[%s0 + $0x2c] sm:$0xf]
    %v25 = vld [vmem:[%s0 + $0x30] sm:$0xf]
    %v26 = vld [vmem:[%s0 + $0x34] sm:$0xf]
    %v27 = vld [vmem:[%s0 + $0x38] sm:$0xf]
    %v28 = vld [vmem:[%s0 + $0x3c] sm:$0xf]
    %v29 = vld [vmem:[%s1] sm:$0xf]
    %v30 = vld [vmem:[%s1 + $0x4] sm:$0xf]
    %v31 = vld [vmem:[%s1 + $0x8] sm:$0xf]
    %v32 = vld [vmem:[%s1 + $0xc] sm:$0xf]
    %v49 = vunpack.c.l.b16 %v13
    %v50 = vunpack.c.l.b16 %v14
    %v51 = vunpack.c.l.b16 %v15
    %v52 = vunpack.c.l.b16 %v16
    %v53 = vunpack.c.l.b16 %v17
    %v54 = vunpack.c.l.b16 %v18
    %v55 = vunpack.c.l.b16 %v19
    %v56 = vunpack.c.l.b16 %v20
    %v57 = vunpack.c.l.b16 %v21
    %v58 = vunpack.c.l.b16 %v22
    %v59 = vunpack.c.l.b16 %v23
    %v60 = vunpack.c.l.b16 %v24
    %v61 = vunpack.c.l.b16 %v25
    %v62 = vunpack.c.l.b16 %v26
    %v63 = vunpack.c.l.b16 %v27
    %v64 = vunpack.c.l.b16 %v28
    %v65 = vpack.c.b16 %v50, %v49
    %v66 = vpack.c.b16 %v52, %v51
    %v67 = vpack.c.b16 %v54, %v53
    %v68 = vpack.c.b16 %v56, %v55
    %v69 = vpack.c.b16 %v58, %v57
    %v70 = vpack.c.b16 %v60, %v59
    %v71 = vpack.c.b16 %v62, %v61
    %v72 = vpack.c.b16 %v64, %v63
    %v77 = vunpack.c.l.b16 %v29
    %v78 = vunpack.c.l.b16 %v30
    %v79 = vunpack.c.l.b16 %v31
    %v80 = vunpack.c.l.b16 %v32
    %v81 = vpack.c.b16 %v78, %v77
    %v82 = vpack.c.b16 %v80, %v79
    %vm85 = vcmask 261120
    %v87 = vsel %vm85, %v65, 0
    %v90 = vsel %vm85, %v66, 0
    %v93 = vsel %vm85, %v67, 0
    %v96 = vsel %vm85, %v68, 0
    %v99 = vsel %vm85, %v69, 0
    %v102 = vsel %vm85, %v70, 0
    %v105 = vsel %vm85, %v71, 0
    %v108 = vsel %vm85, %v72, 0
    %110 = vmatprep.subr.bf16.mxu0 0
    %111 = vmatpush1.bf16.msra.mxu0 %v81
    %112 = vmatprep.subr.bf16.mxu0 0
    %113 = vmatpush1.bf16.msra.mxu0 %v82
    %114 = vmatprep.subr.bf16.mxu0 0
    %115 = vmatpush1.bf16.msra.mxu0 0
    %116 = vmatprep.subr.bf16.mxu0 0
    %117 = vmatpush1.bf16.msra.mxu0 0
    %118 = vmatprep.subr.bf16.mxu0 0
    %119 = vmatpush1.bf16.msra.mxu0 0
    %120 = vmatprep.subr.bf16.mxu0 0
    %121 = vmatpush1.bf16.msra.mxu0 0
    %122 = vmatprep.subr.bf16.mxu0 0
    %123 = vmatpush1.bf16.msra.mxu0 0
    %124 = vmatprep.subr.bf16.mxu0 0
    %125 = vmatpush1.bf16.msra.mxu0 0
    %126 = vmatprep.subr.bf16.mxu0 0
    %127 = vmatpush1.bf16.msra.mxu0 0
    %128 = vmatprep.subr.bf16.mxu0 0
    %129 = vmatpush1.bf16.msra.mxu0 0
    %130 = vmatprep.subr.bf16.mxu0 0
    %131 = vmatpush1.bf16.msra.mxu0 0
    %132 = vmatprep.subr.bf16.mxu0 0
    %133 = vmatpush1.bf16.msra.mxu0 0
    %134 = vmatprep.subr.bf16.mxu0 0
    %135 = vmatpush1.bf16.msra.mxu0 0
    %136 = vmatprep.subr.bf16.mxu0 0
    %137 = vmatpush1.bf16.msra.mxu0 0
    %138 = vmatprep.subr.bf16.mxu0 0
    %139 = vmatpush1.bf16.msra.mxu0 0
    %140 = vmatprep.subr.bf16.mxu0 0
    %141 = vmatpush1.bf16.msra.mxu0 0
    %142 = vmatprep.mubr.bf16.mxu0 0
    %143 = vmatmul.mubr.bf16.gmra.mrb[0].mxu0 %v87
    %v144 = vpop.f32.mrb[0].mxu0
    %v145 = vadd.f32 0.0, %v144
    %v146 = vpop.f32.mrb[0].mxu0
    %v147 = vpop.f32.mrb[0].mxu0
    %v148 = vadd.f32 0.0, %v147
    %v149 = vpop.f32.mrb[0].mxu0
    %150 = vmatprep.mubr.bf16.mxu0 0
    %151 = vmatmul.mubr.bf16.gmra.mrb[0].mxu0 %v90
    %v152 = vpop.f32.mrb[0].mxu0
    %v153 = vadd.f32 0.0, %v152
    %v154 = vpop.f32.mrb[0].mxu0
    %v155 = vpop.f32.mrb[0].mxu0
    %v156 = vadd.f32 0.0, %v155
    %v157 = vpop.f32.mrb[0].mxu0
    %158 = vmatprep.mubr.bf16.mxu0 0
    %159 = vmatmul.mubr.bf16.gmra.mrb[0].mxu0 %v93
    %v160 = vpop.f32.mrb[0].mxu0
    %v161 = vadd.f32 0.0, %v160
    %v162 = vpop.f32.mrb[0].mxu0
    %v163 = vpop.f32.mrb[0].mxu0
    %v164 = vadd.f32 0.0, %v163
    %v165 = vpop.f32.mrb[0].mxu0
    %166 = vmatprep.mubr.bf16.mxu0 0
    %167 = vmatmul.mubr.bf16.gmra.mrb[0].mxu0 %v96
    %v168 = vpop.f32.mrb[0].mxu0
    %v169 = vadd.f32 0.0, %v168
    %v170 = vpop.f32.mrb[0].mxu0
    %v171 = vpop.f32.mrb[0].mxu0
    %v172 = vadd.f32 0.0, %v171
    %v173 = vpop.f32.mrb[0].mxu0
    %174 = vmatprep.mubr.bf16.mxu0 0
    %175 = vmatmul.mubr.bf16.gmra.mrb[0].mxu0 %v99
    %v176 = vpop.f32.mrb[0].mxu0
    %v177 = vadd.f32 0.0, %v176
    %v178 = vpop.f32.mrb[0].mxu0
    %v179 = vpop.f32.mrb[0].mxu0
    %v180 = vadd.f32 0.0, %v179
    %v181 = vpop.f32.mrb[0].mxu0
    %182 = vmatprep.mubr.bf16.mxu0 0
    %183 = vmatmul.mubr.bf16.gmra.mrb[0].mxu0 %v102
    %v184 = vpop.f32.mrb[0].mxu0
    %v185 = vadd.f32 0.0, %v184
    %v186 = vpop.f32.mrb[0].mxu0
    %v187 = vpop.f32.mrb[0].mxu0
    %v188 = vadd.f32 0.0, %v187
    %v189 = vpop.f32.mrb[0].mxu0
    %190 = vmatprep.mubr.bf16.mxu0 0
    %191 = vmatmul.mubr.bf16.gmra.mrb[0].mxu0 %v105
    %v192 = vpop.f32.mrb[0].mxu0
    %v193 = vadd.f32 0.0, %v192
    %v194 = vpop.f32.mrb[0].mxu0
    %v195 = vpop.f32.mrb[0].mxu0
    %v196 = vadd.f32 0.0, %v195
    %v197 = vpop.f32.mrb[0].mxu0
    %198 = vmatprep.mubr.bf16.mxu0 0
    %199 = vmatmul.mubr.bf16.gmra.mrb[0].mxu0 %v108
    %v200 = vpop.f32.mrb[0].mxu0
    %v201 = vadd.f32 0.0, %v200
    %v202 = vpop.f32.mrb[0].mxu0
    %v203 = vpop.f32.mrb[0].mxu0
    %v204 = vadd.f32 0.0, %v203
    %v205 = vpop.f32.mrb[0].mxu0
    %206 = vdwg.mxu0
    %v207 = vpack.c.bf16 %v148, %v145
    %v208 = vpack.c.bf16 %v156, %v153
    %v209 = vpack.c.bf16 %v164, %v161
    %v210 = vpack.c.bf16 %v172, %v169
    %v211 = vpack.c.bf16 %v180, %v177
    %v212 = vpack.c.bf16 %v188, %v185
    %v213 = vpack.c.bf16 %v196, %v193
    %v214 = vpack.c.bf16 %v204, %v201
    %v223 = vunpack.c.l.b16 %v207
    %v224 = vunpack.c.h.b16 %v207
    %v225 = vunpack.c.l.b16 %v208
    %v226 = vunpack.c.h.b16 %v208
    %v227 = vunpack.c.l.b16 %v209
    %v228 = vunpack.c.h.b16 %v209
    %v229 = vunpack.c.l.b16 %v210
    %v230 = vunpack.c.h.b16 %v210
    %v231 = vunpack.c.l.b16 %v211
    %v232 = vunpack.c.h.b16 %v211
    %v233 = vunpack.c.l.b16 %v212
    %v234 = vunpack.c.h.b16 %v212
    %v235 = vunpack.c.l.b16 %v213
    %v236 = vunpack.c.h.b16 %v213
    %v237 = vunpack.c.l.b16 %v214
    %v238 = vunpack.c.h.b16 %v214
    %v239 = vpack.c.b16 %v223, %v223
    %v240 = vpack.c.b16 %v224, %v224
    %v241 = vpack.c.b16 %v225, %v225
    %v242 = vpack.c.b16 %v226, %v226
    %v243 = vpack.c.b16 %v227, %v227
    %v244 = vpack.c.b16 %v228, %v228
    %v245 = vpack.c.b16 %v229, %v229
    %v246 = vpack.c.b16 %v230, %v230
    %v247 = vpack.c.b16 %v231, %v231
    %v248 = vpack.c.b16 %v232, %v232
    %v249 = vpack.c.b16 %v233, %v233
    %v250 = vpack.c.b16 %v234, %v234
    %v251 = vpack.c.b16 %v235, %v235
    %v252 = vpack.c.b16 %v236, %v236
    %v253 = vpack.c.b16 %v237, %v237
    %v254 = vpack.c.b16 %v238, %v238
    %271 = vst [vmem:[#allocation2] sm:$0xf] %v239
    %272 = vst [vmem:[#allocation2 + $0x4] sm:$0xf] %v240
    %273 = vst [vmem:[#allocation2 + $0x8] sm:$0xf] %v241
    %274 = vst [vmem:[#allocation2 + $0xc] sm:$0xf] %v242
    %275 = vst [vmem:[#allocation2 + $0x10] sm:$0xf] %v243
    %276 = vst [vmem:[#allocation2 + $0x14] sm:$0xf] %v244
    %277 = vst [vmem:[#allocation2 + $0x18] sm:$0xf] %v245
    %278 = vst [vmem:[#allocation2 + $0x1c] sm:$0xf] %v246
    %279 = vst [vmem:[#allocation2 + $0x20] sm:$0xf] %v247
    %280 = vst [vmem:[#allocation2 + $0x24] sm:$0xf] %v248
    %281 = vst [vmem:[#allocation2 + $0x28] sm:$0xf] %v249
    %282 = vst [vmem:[#allocation2 + $0x2c] sm:$0xf] %v250
    %283 = vst [vmem:[#allocation2 + $0x30] sm:$0xf] %v251
    %284 = vst [vmem:[#allocation2 + $0x34] sm:$0xf] %v252
    %285 = vst [vmem:[#allocation2 + $0x38] sm:$0xf] %v253
    %286 = vst [vmem:[#allocation2 + $0x3c] sm:$0xf] %v254
    // Predicated region
    $region10: #{tpu_custom_call.1} parent=1 // pred_check
      _
    $region11: #{tpu_custom_call.1} parent=1 // pred_check_branch
      %288 = sbr.rel (0) target = $region13
    $region12: #{tpu_custom_call.1} parent=1 // pred_region
      %s290 = ssub.s32 1024, 1024
      %291 = vsyncadd [#allocation3], %s290
      %s292 = sshll.u32 [#allocation2], 4
      %s293 = int_to_ptr.vmem [resolvable:$true] %s292
      %298 = dma.vmem_to_hbm [thread:$0]  %s293, 1024, %s2, [#allocation3], 64, 64, 4
    $region13: #{tpu_custom_call.1} parent=1 // pred_fallthru
      _
    // Predicated region
    $region14: #{tpu_custom_call.1} parent=1 // pred_check
      _
    $region15: #{tpu_custom_call.1} parent=1 // pred_check_branch
      %300 = sbr.rel (0) target = $region17
    $region16: #{tpu_custom_call.1} parent=1 // pred_region
      %301 = dma.done [#allocation3], 1024
    $region17: #{tpu_custom_call.1} parent=1 // pred_fallthru
      _
    %302 = vsyncpa [#allocation3], 1

</llo_original>
